<compile_context>
chip_gen: v5e
topology: v5e:2x2
jax: 0.10.0
libtpu: 0.0.40
codegen_flags: <defaults>
</compile_context>

<pallas_src>
import functools

import jax
import jax.numpy as jnp
from jax import lax
from jax.experimental import pallas as pl
from jax.experimental.pallas import tpu as pltpu


IN_FEATURES = 1200          # 6 channels * 200 timesteps (nn.Flatten)
HIDDEN = 128
LATENT = 64


def _round_up(x, m):
    return (x + m - 1) // m * m


def _inertial_encoder_kernel(x_ref, w1_ref, b1_ref, w2_ref, b2_ref, o_ref):
    # x_ref:  (TB, 1200) f32     w1_ref: (1200, 128) bf16    b1_ref: (1, 128) f32
    # w2_ref: (128, 64)  bf16    b2_ref: (1, 64)     f32     o_ref:  (TB, 64) f32

    # ---- Linear(1200 -> 128): cast activations to bf16 in-kernel, f32 MXU accumulation ----
    x = x_ref[...].astype(jnp.bfloat16)
    h = jnp.dot(x, w1_ref[...], preferred_element_type=jnp.float32) + b1_ref[...]

    # ---- Mish: h * tanh(softplus(h)) with a single exp (overflow-safe rewrite) ----
    # tanh(log(1+e^h)) = (1+2u)/(1+2u+2u^2)   with u = e^{-h}  for h >= 0
    #                  = (u^2+2u)/(u^2+2u+2)  with u = e^{+h}  for h <  0
    u = jnp.exp(-jnp.abs(h))
    pos = h >= 0.0
    num = jnp.where(pos, 1.0 + 2.0 * u, u * (u + 2.0))
    den = num + jnp.where(pos, 2.0 * u * u, 2.0)
    h = h * (num * pl.reciprocal(den, approx=False))

    # ---- Dropout(p): identity in eval/inference mode ----
    # TODO(synk): training-mode dropout (pltpu.prng_seed / prng_random_bits mask) not emitted.

    # ---- Linear(128 -> 64): bf16 operands, f32 accumulation ----
    z = jnp.dot(h.astype(jnp.bfloat16), w2_ref[...],
                preferred_element_type=jnp.float32) + b2_ref[...]

    # ---- F.normalize(dim=-1) ----
    sumsq = jnp.sum(z * z, axis=-1, keepdims=True)
    inv = lax.rsqrt(jnp.maximum(sumsq, 1e-24))   # == 1 / clamp_min(||z||, 1e-12)
    o_ref[...] = (z * inv).astype(o_ref.dtype)


def prepare_params(w1, b1, w2, b2):
    """One-time parameter dtype/layout prep — call once, reuse across inference steps."""
    return (jnp.asarray(w1, jnp.bfloat16),                       # (1200, 128)
            jnp.asarray(b1, jnp.float32).reshape(1, HIDDEN),     # (1, 128)
            jnp.asarray(w2, jnp.bfloat16),                       # (128, 64)
            jnp.asarray(b2, jnp.float32).reshape(1, LATENT))     # (1, 64)


@functools.partial(jax.jit, static_argnames=("tb",))
def inertial_encoder(inertial, w1p, b1p, w2p, b2p, *, tb=512):
    """inertial: (B, C, T) with C*T == 1200. Params from prepare_params().
    Returns (B, LATENT) f32, L2-normalized along the last dim."""
    B = inertial.shape[0]
    x = inertial.reshape(B, IN_FEATURES)      # nn.Flatten(); layout-only, no copy

    # Batch tile: f32 x needs sublane multiples of 8. Aim for >= 2 tiles so v7x's two
    # TensorCores both get work; clamp at 1024 so double-buffered x fits v5e's 16 MiB
    # scoped-VMEM default without an override.
    if B <= 8:
        TB = B
    else:
        TB = max(8, min(tb, 1024, _round_up(pl.cdiv(B, 2), 8)))
    grid = (pl.cdiv(B, TB),)   # partial last tile: OOB reads harmless, OOB writes masked

    cost = pl.CostEstimate(
        flops=2 * B * IN_FEATURES * HIDDEN + 2 * B * HIDDEN * LATENT,
        transcendentals=B * HIDDEN,                    # one exp per hidden activation
        bytes_accessed=(B * IN_FEATURES * 4            # x (f32 in)
                        + IN_FEATURES * HIDDEN * 2     # w1 (bf16)
                        + HIDDEN * LATENT * 2          # w2 (bf16)
                        + (HIDDEN + LATENT) * 4        # biases
                        + B * LATENT * 4),             # output
    )

    return pl.pallas_call(
        _inertial_encoder_kernel,
        out_shape=jax.ShapeDtypeStruct((B, LATENT), jnp.float32),
        grid=grid,
        in_specs=[
            pl.BlockSpec((TB, IN_FEATURES), lambda i: (i, 0)),    # x: tiled over batch
            pl.BlockSpec((IN_FEATURES, HIDDEN), lambda i: (0, 0)),  # w1: VMEM-resident
            pl.BlockSpec((1, HIDDEN), lambda i: (0, 0)),
            pl.BlockSpec((HIDDEN, LATENT), lambda i: (0, 0)),
            pl.BlockSpec((1, LATENT), lambda i: (0, 0)),
        ],
        out_specs=pl.BlockSpec((TB, LATENT), lambda i: (i, 0)),
        compiler_params=pltpu.CompilerParams(
            # Independent batch tiles -> shard across both TensorCores on v7x.
            dimension_semantics=("parallel",),
        ),
        cost_estimate=cost,
    )(x, w1p, b1p, w2p, b2p)


def _init_params(key):
    """Deterministic parameter init matching the PyTorch module's shapes ((in, out) layout)."""
    k1, k2, k3, k4 = jax.random.split(key, 4)
    lim1 = 1.0 / (IN_FEATURES ** 0.5)
    lim2 = 1.0 / (HIDDEN ** 0.5)
    w1 = jax.random.uniform(k1, (IN_FEATURES, HIDDEN), jnp.float32, -lim1, lim1)
    b1 = jax.random.uniform(k2, (HIDDEN,), jnp.float32, -lim1, lim1)
    w2 = jax.random.uniform(k3, (HIDDEN, LATENT), jnp.float32, -lim2, lim2)
    b2 = jax.random.uniform(k4, (LATENT,), jnp.float32, -lim2, lim2)
    return w1, b1, w2, b2


def _reference_matched(inertial, w1, b1, w2, b2):
    """Pure-JAX reference matching the kernel's bf16-operand / f32-accumulate matmuls."""
    x = inertial.reshape(inertial.shape[0], -1)
    h = jnp.dot(x.astype(jnp.bfloat16), w1.astype(jnp.bfloat16),
                preferred_element_type=jnp.float32) + b1
    h = h * jnp.tanh(jax.nn.softplus(h))
    z = jnp.dot(h.astype(jnp.bfloat16), w2.astype(jnp.bfloat16),
                preferred_element_type=jnp.float32) + b2
    n = jnp.maximum(jnp.linalg.norm(z, axis=-1, keepdims=True), 1e-12)
    return z / n


def _reference_f32(inertial, w1, b1, w2, b2):
    """Full-f32 reference of the original module semantics (loose-tolerance check)."""
    x = inertial.reshape(inertial.shape[0], -1)
    h = jnp.dot(x, w1, precision=lax.Precision.HIGHEST) + b1
    h = h * jnp.tanh(jax.nn.softplus(h))
    z = jnp.dot(h, w2, precision=lax.Precision.HIGHEST) + b2
    n = jnp.maximum(jnp.linalg.norm(z, axis=-1, keepdims=True), 1e-12)
    return z / n


if __name__ == "__main__":
    key = jax.random.PRNGKey(0)
    k_in, k_par, k_in2 = jax.random.split(key, 3)
    w1, b1, w2, b2 = _init_params(k_par)
    params = prepare_params(w1, b1, w2, b2)   # one-time prep, reused across calls

    # (B, C, T) = (2, 6, 200) -> flattens to 1200 features per sample. Single (2, ...) tile.
    inertial = jax.random.normal(k_in, (2, 6, 200), dtype=jnp.float32)
    out = jax.block_until_ready(inertial_encoder(inertial, *params))
    assert out.shape == (2, LATENT)
    # 2e-3 tolerance: h is re-quantized to bf16 before the second matmul, so a single bf16
    # rounding-boundary flip between the kernel's Mish rewrite and the reference's
    # tanh(softplus) can shift an output element by ~5e-4.
    assert jnp.allclose(out, _reference_matched(inertial, w1, b1, w2, b2),
                        atol=2e-3, rtol=2e-3), "mismatch vs bf16-matched reference"
    assert jnp.allclose(out, _reference_f32(inertial, w1, b1, w2, b2),
                        atol=3e-2, rtol=3e-2), "mismatch vs f32 module reference"
    assert jnp.allclose(jnp.linalg.norm(out, axis=-1), 1.0, atol=1e-5)

    # Multi-tile grid with a ragged last tile: B=40, tb=16 -> TB=16, grid=(3,),
    # last tile has 8 valid rows + 8 masked rows (exercises masked OOB writeback).
    inertial2 = jax.random.normal(k_in2, (40, 6, 200), dtype=jnp.float32)
    out2 = jax.block_until_ready(inertial_encoder(inertial2, *params, tb=16))
    assert out2.shape == (40, LATENT)
    assert jnp.allclose(out2, _reference_matched(inertial2, w1, b1, w2, b2),
                        atol=2e-3, rtol=2e-3), "mismatch vs reference (ragged tiled batch)"
    assert jnp.allclose(jnp.linalg.norm(out2, axis=-1), 1.0, atol=1e-5)

    print("KERNEL_OK")
</pallas_src>

<mosaic_0001>
module attributes {stable_mosaic.version = 11 : i64} {
  func.func @_inertial_encoder_kernel(%arg0: i32, %arg1: memref<2x1200xf32, #tpu.memory_space<vmem>>, %arg2: memref<1200x128xbf16, #tpu.memory_space<vmem>>, %arg3: memref<1x128xf32, #tpu.memory_space<vmem>>, %arg4: memref<128x64xbf16, #tpu.memory_space<vmem>>, %arg5: memref<1x64xf32, #tpu.memory_space<vmem>>, %arg6: memref<2x64xf32, #tpu.memory_space<vmem>>) attributes {dimension_semantics = [#tpu.dimension_semantics<parallel>], iteration_bounds = array<i64: 1>, scalar_prefetch = 0 : i64, scratch_operands = 0 : i64, tpu.core_type = #tpu.core_type<tc>, window_params = [{transform_indices = @transform_0, window_bounds = array<i64: 2, 1200>}, {pipeline_mode = #tpu.pipeline_mode<synchronous>, transform_indices = @transform_1, window_bounds = array<i64: 1200, 128>}, {pipeline_mode = #tpu.pipeline_mode<synchronous>, transform_indices = @transform_2, window_bounds = array<i64: 1, 128>}, {pipeline_mode = #tpu.pipeline_mode<synchronous>, transform_indices = @transform_3, window_bounds = array<i64: 128, 64>}, {pipeline_mode = #tpu.pipeline_mode<synchronous>, transform_indices = @transform_4, window_bounds = array<i64: 1, 64>}, {transform_indices = @transform_5, window_bounds = array<i64: 2, 64>}]} {
    %c0 = arith.constant 0 : index
    %c0_0 = arith.constant 0 : index
    %0 = vector.load %arg1[%c0, %c0_0] : memref<2x1200xf32, #tpu.memory_space<vmem>>, vector<2x1200xf32>
    %1 = arith.truncf %0 : vector<2x1200xf32> to vector<2x1200xbf16>
    %c0_1 = arith.constant 0 : index
    %c0_2 = arith.constant 0 : index
    %2 = vector.load %arg2[%c0_1, %c0_2] : memref<1200x128xbf16, #tpu.memory_space<vmem>>, vector<1200x128xbf16>
    %cst = arith.constant dense<0.000000e+00> : vector<2x128xf32>
    %3 = tpu.matmul %1, %2, %cst {dimension_numbers = #tpu.dot_dimension_numbers<[1], [0], [0], [1], [0, 0, 1, 1], [], []>} : vector<2x1200xbf16>, vector<1200x128xbf16>, vector<2x128xf32> -> vector<2x128xf32>
    %c0_3 = arith.constant 0 : index
    %c0_4 = arith.constant 0 : index
    %4 = vector.load %arg3[%c0_3, %c0_4] : memref<1x128xf32, #tpu.memory_space<vmem>>, vector<1x128xf32>
    %5 = vector.broadcast %4 : vector<1x128xf32> to vector<2x128xf32>
    %6 = arith.addf %3, %5 : vector<2x128xf32>
    %7 = math.absf %6 : vector<2x128xf32>
    %cst_5 = arith.constant 0.000000e+00 : f32
    %8 = vector.broadcast %cst_5 : f32 to vector<2x128xf32>
    %9 = arith.subf %8, %7 : vector<2x128xf32>
    %10 = math.exp %9 : vector<2x128xf32>
    %cst_6 = arith.constant 0.000000e+00 : f32
    %11 = vector.broadcast %cst_6 : f32 to vector<2x128xf32>
    %12 = arith.cmpf oge, %6, %11 : vector<2x128xf32>
    %cst_7 = arith.constant 2.000000e+00 : f32
    %13 = vector.broadcast %cst_7 : f32 to vector<2x128xf32>
    %14 = arith.mulf %13, %10 : vector<2x128xf32>
    %cst_8 = arith.constant 1.000000e+00 : f32
    %15 = vector.broadcast %cst_8 : f32 to vector<2x128xf32>
    %16 = arith.addf %15, %14 : vector<2x128xf32>
    %cst_9 = arith.constant 2.000000e+00 : f32
    %17 = vector.broadcast %cst_9 : f32 to vector<2x128xf32>
    %18 = arith.addf %10, %17 : vector<2x128xf32>
    %19 = arith.mulf %10, %18 : vector<2x128xf32>
    %20 = arith.select %12, %16, %19 : vector<2x128xi1>, vector<2x128xf32>
    %cst_10 = arith.constant 2.000000e+00 : f32
    %21 = vector.broadcast %cst_10 : f32 to vector<2x128xf32>
    %22 = arith.mulf %21, %10 : vector<2x128xf32>
    %23 = arith.mulf %22, %10 : vector<2x128xf32>
    %cst_11 = arith.constant 2.000000e+00 : f32
    %24 = vector.broadcast %cst_11 : f32 to vector<2x128xf32>
    %25 = arith.select %12, %23, %24 : vector<2x128xi1>, vector<2x128xf32>
    %26 = arith.addf %20, %25 : vector<2x128xf32>
    %27 = tpu.reciprocal %26 : vector<2x128xf32> -> vector<2x128xf32>
    %28 = arith.mulf %20, %27 : vector<2x128xf32>
    %29 = arith.mulf %6, %28 : vector<2x128xf32>
    %30 = arith.truncf %29 : vector<2x128xf32> to vector<2x128xbf16>
    %c0_12 = arith.constant 0 : index
    %c0_13 = arith.constant 0 : index
    %31 = vector.load %arg4[%c0_12, %c0_13] : memref<128x64xbf16, #tpu.memory_space<vmem>>, vector<128x64xbf16>
    %cst_14 = arith.constant dense<0.000000e+00> : vector<2x64xf32>
    %32 = tpu.matmul %30, %31, %cst_14 {dimension_numbers = #tpu.dot_dimension_numbers<[1], [0], [0], [1], [0, 0, 1, 1], [], []>} : vector<2x128xbf16>, vector<128x64xbf16>, vector<2x64xf32> -> vector<2x64xf32>
    %c0_15 = arith.constant 0 : index
    %c0_16 = arith.constant 0 : index
    %33 = vector.load %arg5[%c0_15, %c0_16] : memref<1x64xf32, #tpu.memory_space<vmem>>, vector<1x64xf32>
    %34 = vector.broadcast %33 : vector<1x64xf32> to vector<2x64xf32>
    %35 = arith.addf %32, %34 : vector<2x64xf32>
    %36 = arith.mulf %35, %35 : vector<2x64xf32>
    %cst_17 = arith.constant dense<0.000000e+00> : vector<2xf32>
    %37 = vector.multi_reduction <add>, %36, %cst_17 [1] : vector<2x64xf32> to vector<2xf32>
    %38 = vector.shape_cast %37 : vector<2xf32> to vector<2x1xf32>
    %cst_18 = arith.constant 1.000000e-24 : f32
    %39 = vector.broadcast %cst_18 : f32 to vector<2x1xf32>
    %40 = arith.maximumf %38, %39 : vector<2x1xf32>
    %41 = math.rsqrt %40 : vector<2x1xf32>
    %42 = vector.broadcast %41 : vector<2x1xf32> to vector<2x64xf32>
    %43 = arith.mulf %35, %42 : vector<2x64xf32>
    %c0_19 = arith.constant 0 : index
    %c0_20 = arith.constant 0 : index
    %44 = vector.load %arg6[%c0_19, %c0_20] : memref<2x64xf32, #tpu.memory_space<vmem>>, vector<2x64xf32>
    tpu.vector_store %arg6[%c0_19, %c0_20], %43 {strides = array<i32>} : memref<2x64xf32, #tpu.memory_space<vmem>>, vector<2x64xf32>,
    return
  }
  func.func @transform_0(%arg0: i32) -> (i32, i32) {
    %c0_i32 = arith.constant 0 : i32
    %c0_i32_0 = arith.constant 0 : i32
    return %arg0, %c0_i32 : i32, i32
  }
  func.func @transform_1(%arg0: i32) -> (i32, i32) {
    %c0_i32 = arith.constant 0 : i32
    %c0_i32_0 = arith.constant 0 : i32
    %c0_i32_1 = arith.constant 0 : i32
    return %c0_i32, %c0_i32_0 : i32, i32
  }
  func.func @transform_2(%arg0: i32) -> (i32, i32) {
    %c0_i32 = arith.constant 0 : i32
    %c0_i32_0 = arith.constant 0 : i32
    %c0_i32_1 = arith.constant 0 : i32
    return %c0_i32, %c0_i32_0 : i32, i32
  }
  func.func @transform_3(%arg0: i32) -> (i32, i32) {
    %c0_i32 = arith.constant 0 : i32
    %c0_i32_0 = arith.constant 0 : i32
    %c0_i32_1 = arith.constant 0 : i32
    return %c0_i32, %c0_i32_0 : i32, i32
  }
  func.func @transform_4(%arg0: i32) -> (i32, i32) {
    %c0_i32 = arith.constant 0 : i32
    %c0_i32_0 = arith.constant 0 : i32
    %c0_i32_1 = arith.constant 0 : i32
    return %c0_i32, %c0_i32_0 : i32, i32
  }
  func.func @transform_5(%arg0: i32) -> (i32, i32) {
    %c0_i32 = arith.constant 0 : i32
    %c0_i32_0 = arith.constant 0 : i32
    return %arg0, %c0_i32 : i32, i32
  }
}

</mosaic_0001>

<llo_original>
// kernel: inertial_encoder.1
$region0: #{inertial_encoder.1}
  #allocation0 [shape = 'u32[]', space=smem, size = 0x4, offset = 0x4, fixed_abs, tag = 'smem constant byte address 0x4 - core index']
  #allocation1 [shape = 'u32[72,128]{1,0:T(1,128)}', space=vmem, size = 0x9000, scoped, tag = 'internal scratch']
  %s0 = inlined_call_operand.vmem [shape: f32[2,1200], index: 0, kind: input, shape index: {}]
  %s1 = inlined_call_operand.hbm [shape: bf16[1200,128], index: 1, kind: input, shape index: {}]
  %s2 = inlined_call_operand.vmem [shape: f32[1,128], index: 2, kind: input, shape index: {}]
  %s3 = inlined_call_operand.vmem [shape: bf16[128,64], index: 3, kind: input, shape index: {}]
  %s4 = inlined_call_operand.vmem [shape: f32[1,64], index: 4, kind: input, shape index: {}]
  %s5 = inlined_call_operand.hbm [shape: f32[2,64], index: 5, kind: output, shape index: {}]
  %s6 = sld [smem:[#allocation0]]
  $region34: #{inertial_encoder.1} parent=0
    _
  %s8 = ssub.s32 1, %s6
  %s9 = scalar_select 0, %s8, %s6
  $region1: #{inertial_encoder.1} parent=0
    #allocation2 [shape = 'u8[307200]{0}', space=vmem, size = 0x4b000, scoped, tag = 'input window, operand 1, single buffered']
    #allocation3 [shape = 's32[1]{0}', space=sflag, size = 0x4, scoped, tag = 'scoped memory for inertial_encoder.1']
    #allocation4 [shape = 's32[1]{0}', space=sflag, size = 0x4, scoped, tag = 'scoped memory for inertial_encoder.1']
    #allocation5 [shape = 'u8[1024]{0}', space=vmem, size = 0x400, scoped, tag = 'output window, operand 0, single buffered']
    %10 = vsyncpa [#allocation3], 0
    %11 = vsyncpa [#allocation4], 0
    // Predicated region
    $region2: #{inertial_encoder.1} parent=1 // pred_check
      _
    $region3: #{inertial_encoder.1} parent=1 // pred_check_branch
      %13 = sbr.rel (0) target = $region5
    $region4: #{inertial_encoder.1} parent=1 // pred_region
      _
    $region5: #{inertial_encoder.1} parent=1 // pred_fallthru
      _
    // Predicated region
    $region6: #{inertial_encoder.1} parent=1 // pred_check
      _
    $region7: #{inertial_encoder.1} parent=1 // pred_check_branch
      %15 = sbr.rel (0) target = $region9
    $region8: #{inertial_encoder.1} parent=1 // pred_region
      %17 = vsyncadd [#allocation3], 0
      %s18 = sshll.u32 %s1, 4
      %s19 = int_to_ptr.hbm [resolvable:$true] %s18
      %s20 = sshll.u32 [#allocation2], 4
      %s21 = int_to_ptr.vmem [resolvable:$true] %s20
      %26 = dma.hbm_to_vmem [thread:$0]  %s19, 9600, %s21, [#allocation3], 64, 64, 4
    $region9: #{inertial_encoder.1} parent=1 // pred_fallthru
      _
    // Predicated region
    $region10: #{inertial_encoder.1} parent=1 // pred_check
      _
    $region11: #{inertial_encoder.1} parent=1 // pred_check_branch
      %28 = sbr.rel (0) target = $region13
    $region12: #{inertial_encoder.1} parent=1 // pred_region
      _
    $region13: #{inertial_encoder.1} parent=1 // pred_fallthru
      _
    // Predicated region
    $region14: #{inertial_encoder.1} parent=1 // pred_check
      _
    $region15: #{inertial_encoder.1} parent=1 // pred_check_branch
      %30 = sbr.rel (0) target = $region17
    $region16: #{inertial_encoder.1} parent=1 // pred_region
      _
    $region17: #{inertial_encoder.1} parent=1 // pred_fallthru
      _
    // Predicated region
    $region18: #{inertial_encoder.1} parent=1 // pred_check
      _
    $region19: #{inertial_encoder.1} parent=1 // pred_check_branch
      %32 = sbr.rel (0) target = $region21
    $region20: #{inertial_encoder.1} parent=1 // pred_region
      _
    $region21: #{inertial_encoder.1} parent=1 // pred_fallthru
      _
    // Predicated region
    $region22: #{inertial_encoder.1} parent=1 // pred_check
      _
    $region23: #{inertial_encoder.1} parent=1 // pred_check_branch
      %34 = sbr.rel (0) target = $region25
    $region24: #{inertial_encoder.1} parent=1 // pred_region
      %36 = dma.done [#allocation3], 9600
    $region25: #{inertial_encoder.1} parent=1 // pred_fallthru
      _
    %v38 = vld [vmem:[%s0] sm:$0xff]
    %v39 = vld [vmem:[%s0 + $0x8] sm:$0xff]
    %v40 = vld [vmem:[%s0 + $0x10] sm:$0xf]
    %44 = vst [vmem:[#allocation1] ss:$4 sm:$0xff] %v38
    %s45 = scalar_lea.vmem [#allocation1], 32
    %46 = vst [vmem:[%s45] ss:$4 sm:$0xff] %v39
    %v47 = vld.sshfl [vmem:[#allocation1] sm:$0xff pattern:$0x73625140]
    %v48 = vld.sshfl [vmem:[#allocation1 + $0x8] sm:$0xff pattern:$0x73625140]
    %v49 = vld.sshfl [vmem:[#allocation1 + $0x10] sm:$0xff pattern:$0x73625140]
    %v50 = vld.sshfl [vmem:[#allocation1 + $0x18] sm:$0xff pattern:$0x73625140]
    %v51 = vld.sshfl [vmem:[#allocation1 + $0x20] sm:$0xff pattern:$0x73625140]
    %v52 = vld.sshfl [vmem:[#allocation1 + $0x28] sm:$0xff pattern:$0x73625140]
    %v53 = vld.sshfl [vmem:[#allocation1 + $0x30] sm:$0xff pattern:$0x73625140]
    %v54 = vld.sshfl [vmem:[#allocation1 + $0x38] sm:$0xff pattern:$0x73625140]
    %55 = vst [vmem:[#allocation1] ss:$4 sm:$0xff] %v40
    %v56 = vld.sshfl [vmem:[#allocation1] sm:$0xff pattern:$0x73625140]
    %v57 = vld.sshfl [vmem:[#allocation1 + $0x8] sm:$0xff pattern:$0x73625140]
    %v68 = vpack.c.bf16 %v47, %v47
    %v69 = vpack.c.bf16 %v48, %v48
    %v70 = vpack.c.bf16 %v49, %v49
    %v71 = vpack.c.bf16 %v50, %v50
    %v72 = vpack.c.bf16 %v51, %v51
    %v73 = vpack.c.bf16 %v52, %v52
    %v74 = vpack.c.bf16 %v53, %v53
    %v75 = vpack.c.bf16 %v54, %v54
    %v76 = vpack.c.bf16 %v56, %v56
    %v77 = vpack.c.bf16 %v57, %v57
    %v78 = vld [vmem:[#allocation2] sm:$0xf]
    %v79 = vld [vmem:[#allocation2 + $0x4] sm:$0xf]
    %v80 = vld [vmem:[#allocation2 + $0x8] sm:$0xf]
    %v81 = vld [vmem:[#allocation2 + $0xc] sm:$0xf]
    %v82 = vld [vmem:[#allocation2 + $0x10] sm:$0xf]
    %v83 = vld [vmem:[#allocation2 + $0x14] sm:$0xf]
    %v84 = vld [vmem:[#allocation2 + $0x18] sm:$0xf]
    %v85 = vld [vmem:[#allocation2 + $0x1c] sm:$0xf]
    %v86 = vld [vmem:[#allocation2 + $0x20] sm:$0xf]
    %v87 = vld [vmem:[#allocation2 + $0x24] sm:$0xf]
    %v88 = vld [vmem:[#allocation2 + $0x28] sm:$0xf]
    %v89 = vld [vmem:[#allocation2 + $0x2c] sm:$0xf]
    %v90 = vld [vmem:[#allocation2 + $0x30] sm:$0xf]
    %v91 = vld [vmem:[#allocation2 + $0x34] sm:$0xf]
    %v92 = vld [vmem:[#allocation2 + $0x38] sm:$0xf]
    %v93 = vld [vmem:[#allocation2 + $0x3c] sm:$0xf]
    %v94 = vld [vmem:[#allocation2 + $0x40] sm:$0xf]
    %v95 = vld [vmem:[#allocation2 + $0x44] sm:$0xf]
    %v96 = vld [vmem:[#allocation2 + $0x48] sm:$0xf]
    %v97 = vld [vmem:[#allocation2 + $0x4c] sm:$0xf]
    %v98 = vld [vmem:[#allocation2 + $0x50] sm:$0xf]
    %v99 = vld [vmem:[#allocation2 + $0x54] sm:$0xf]
    %v100 = vld [vmem:[#allocation2 + $0x58] sm:$0xf]
    %v101 = vld [vmem:[#allocation2 + $0x5c] sm:$0xf]
    %v102 = vld [vmem:[#allocation2 + $0x60] sm:$0xf]
    %v103 = vld [vmem:[#allocation2 + $0x64] sm:$0xf]
    %v104 = vld [vmem:[#allocation2 + $0x68] sm:$0xf]
    %v105 = vld [vmem:[#allocation2 + $0x6c] sm:$0xf]
    %v106 = vld [vmem:[#allocation2 + $0x70] sm:$0xf]
    %v107 = vld [vmem:[#allocation2 + $0x74] sm:$0xf]
    %v108 = vld [vmem:[#allocation2 + $0x78] sm:$0xf]
    %v109 = vld [vmem:[#allocation2 + $0x7c] sm:$0xf]
    %v110 = vld [vmem:[#allocation2 + $0x80] sm:$0xf]
    %v111 = vld [vmem:[#allocation2 + $0x84] sm:$0xf]
    %v112 = vld [vmem:[#allocation2 + $0x88] sm:$0xf]
    %v113 = vld [vmem:[#allocation2 + $0x8c] sm:$0xf]
    %v114 = vld [vmem:[#allocation2 + $0x90] sm:$0xf]
    %v115 = vld [vmem:[#allocation2 + $0x94] sm:$0xf]
    %v116 = vld [vmem:[#allocation2 + $0x98] sm:$0xf]
    %v117 = vld [vmem:[#allocation2 + $0x9c] sm:$0xf]
    %v118 = vld [vmem:[#allocation2 + $0xa0] sm:$0xf]
    %v119 = vld [vmem:[#allocation2 + $0xa4] sm:$0xf]
    %v120 = vld [vmem:[#allocation2 + $0xa8] sm:$0xf]
    %v121 = vld [vmem:[#allocation2 + $0xac] sm:$0xf]
    %v122 = vld [vmem:[#allocation2 + $0xb0] sm:$0xf]
    %v123 = vld [vmem:[#allocation2 + $0xb4] sm:$0xf]
    %v124 = vld [vmem:[#allocation2 + $0xb8] sm:$0xf]
    %v125 = vld [vmem:[#allocation2 + $0xbc] sm:$0xf]
    %v126 = vld [vmem:[#allocation2 + $0xc0] sm:$0xf]
    %v127 = vld [vmem:[#allocation2 + $0xc4] sm:$0xf]
    %v128 = vld [vmem:[#allocation2 + $0xc8] sm:$0xf]
    %v129 = vld [vmem:[#allocation2 + $0xcc] sm:$0xf]
    %v130 = vld [vmem:[#allocation2 + $0xd0] sm:$0xf]
    %v131 = vld [vmem:[#allocation2 + $0xd4] sm:$0xf]
    %v132 = vld [vmem:[#allocation2 + $0xd8] sm:$0xf]
    %v133 = vld [vmem:[#allocation2 + $0xdc] sm:$0xf]
    %v134 = vld [vmem:[#allocation2 + $0xe0] sm:$0xf]
    %v135 = vld [vmem:[#allocation2 + $0xe4] sm:$0xf]
    %v136 = vld [vmem:[#allocation2 + $0xe8] sm:$0xf]
    %v137 = vld [vmem:[#allocation2 + $0xec] sm:$0xf]
    %v138 = vld [vmem:[#allocation2 + $0xf0] sm:$0xf]
    %v139 = vld [vmem:[#allocation2 + $0xf4] sm:$0xf]
    %v140 = vld [vmem:[#allocation2 + $0xf8] sm:$0xf]
    %v141 = vld [vmem:[#allocation2 + $0xfc] sm:$0xf]
    %v142 = vld [vmem:[#allocation2 + $0x100] sm:$0xf]
    %v143 = vld [vmem:[#allocation2 + $0x104] sm:$0xf]
    %v144 = vld [vmem:[#allocation2 + $0x108] sm:$0xf]
    %v145 = vld [vmem:[#allocation2 + $0x10c] sm:$0xf]
    %v146 = vld [vmem:[#allocation2 + $0x110] sm:$0xf]
    %v147 = vld [vmem:[#allocation2 + $0x114] sm:$0xf]
    %v148 = vld [vmem:[#allocation2 + $0x118] sm:$0xf]
    %v149 = vld [vmem:[#allocation2 + $0x11c] sm:$0xf]
    %v150 = vld [vmem:[#allocation2 + $0x120] sm:$0xf]
    %v151 = vld [vmem:[#allocation2 + $0x124] sm:$0xf]
    %v152 = vld [vmem:[#allocation2 + $0x128] sm:$0xf]
    %v153 = vld [vmem:[#allocation2 + $0x12c] sm:$0xf]
    %v154 = vld [vmem:[#allocation2 + $0x130] sm:$0xf]
    %v155 = vld [vmem:[#allocation2 + $0x134] sm:$0xf]
    %v156 = vld [vmem:[#allocation2 + $0x138] sm:$0xf]
    %v157 = vld [vmem:[#allocation2 + $0x13c] sm:$0xf]
    %v158 = vld [vmem:[#allocation2 + $0x140] sm:$0xf]
    %v159 = vld [vmem:[#allocation2 + $0x144] sm:$0xf]
    %v160 = vld [vmem:[#allocation2 + $0x148] sm:$0xf]
    %v161 = vld [vmem:[#allocation2 + $0x14c] sm:$0xf]
    %v162 = vld [vmem:[#allocation2 + $0x150] sm:$0xf]
    %v163 = vld [vmem:[#allocation2 + $0x154] sm:$0xf]
    %v164 = vld [vmem:[#allocation2 + $0x158] sm:$0xf]
    %v165 = vld [vmem:[#allocation2 + $0x15c] sm:$0xf]
    %v166 = vld [vmem:[#allocation2 + $0x160] sm:$0xf]
    %v167 = vld [vmem:[#allocation2 + $0x164] sm:$0xf]
    %v168 = vld [vmem:[#allocation2 + $0x168] sm:$0xf]
    %v169 = vld [vmem:[#allocation2 + $0x16c] sm:$0xf]
    %v170 = vld [vmem:[#allocation2 + $0x170] sm:$0xf]
    %v171 = vld [vmem:[#allocation2 + $0x174] sm:$0xf]
    %v172 = vld [vmem:[#allocation2 + $0x178] sm:$0xf]
    %v173 = vld [vmem:[#allocation2 + $0x17c] sm:$0xf]
    %v174 = vld [vmem:[#allocation2 + $0x180] sm:$0xf]
    %v175 = vld [vmem:[#allocation2 + $0x184] sm:$0xf]
    %v176 = vld [vmem:[#allocation2 + $0x188] sm:$0xf]
    %v177 = vld [vmem:[#allocation2 + $0x18c] sm:$0xf]
    %v178 = vld [vmem:[#allocation2 + $0x190] sm:$0xf]
    %v179 = vld [vmem:[#allocation2 + $0x194] sm:$0xf]
    %v180 = vld [vmem:[#allocation2 + $0x198] sm:$0xf]
    %v181 = vld [vmem:[#allocation2 + $0x19c] sm:$0xf]
    %v182 = vld [vmem:[#allocation2 + $0x1a0] sm:$0xf]
    %v183 = vld [vmem:[#allocation2 + $0x1a4] sm:$0xf]
    %v184 = vld [vmem:[#allocation2 + $0x1a8] sm:$0xf]
    %v185 = vld [vmem:[#allocation2 + $0x1ac] sm:$0xf]
    %v186 = vld [vmem:[#allocation2 + $0x1b0] sm:$0xf]
    %v187 = vld [vmem:[#allocation2 + $0x1b4] sm:$0xf]
    %v188 = vld [vmem:[#allocation2 + $0x1b8] sm:$0xf]
    %v189 = vld [vmem:[#allocation2 + $0x1bc] sm:$0xf]
    %v190 = vld [vmem:[#allocation2 + $0x1c0] sm:$0xf]
    %v191 = vld [vmem:[#allocation2 + $0x1c4] sm:$0xf]
    %v192 = vld [vmem:[#allocation2 + $0x1c8] sm:$0xf]
    %v193 = vld [vmem:[#allocation2 + $0x1cc] sm:$0xf]
    %v194 = vld [vmem:[#allocation2 + $0x1d0] sm:$0xf]
    %v195 = vld [vmem:[#allocation2 + $0x1d4] sm:$0xf]
    %v196 = vld [vmem:[#allocation2 + $0x1d8] sm:$0xf]
    %v197 = vld [vmem:[#allocation2 + $0x1dc] sm:$0xf]
    %v198 = vld [vmem:[#allocation2 + $0x1e0] sm:$0xf]
    %v199 = vld [vmem:[#allocation2 + $0x1e4] sm:$0xf]
    %v200 = vld [vmem:[#allocation2 + $0x1e8] sm:$0xf]
    %v201 = vld [vmem:[#allocation2 + $0x1ec] sm:$0xf]
    %v202 = vld [vmem:[#allocation2 + $0x1f0] sm:$0xf]
    %v203 = vld [vmem:[#allocation2 + $0x1f4] sm:$0xf]
    %v204 = vld [vmem:[#allocation2 + $0x1f8] sm:$0xf]
    %v205 = vld [vmem:[#allocation2 + $0x1fc] sm:$0xf]
    %v206 = vld [vmem:[#allocation2 + $0x200] sm:$0xf]
    %v207 = vld [vmem:[#allocation2 + $0x204] sm:$0xf]
    %v208 = vld [vmem:[#allocation2 + $0x208] sm:$0xf]
    %v209 = vld [vmem:[#allocation2 + $0x20c] sm:$0xf]
    %v210 = vld [vmem:[#allocation2 + $0x210] sm:$0xf]
    %v211 = vld [vmem:[#allocation2 + $0x214] sm:$0xf]
    %v212 = vld [vmem:[#allocation2 + $0x218] sm:$0xf]
    %v213 = vld [vmem:[#allocation2 + $0x21c] sm:$0xf]
    %v214 = vld [vmem:[#allocation2 + $0x220] sm:$0xf]
    %v215 = vld [vmem:[#allocation2 + $0x224] sm:$0xf]
    %v216 = vld [vmem:[#allocation2 + $0x228] sm:$0xf]
    %v217 = vld [vmem:[#allocation2 + $0x22c] sm:$0xf]
    %v218 = vld [vmem:[#allocation2 + $0x230] sm:$0xf]
    %v219 = vld [vmem:[#allocation2 + $0x234] sm:$0xf]
    %v220 = vld [vmem:[#allocation2 + $0x238] sm:$0xf]
    %v221 = vld [vmem:[#allocation2 + $0x23c] sm:$0xf]
    %v222 = vld [vmem:[#allocation2 + $0x240] sm:$0xf]
    %v223 = vld [vmem:[#allocation2 + $0x244] sm:$0xf]
    %v224 = vld [vmem:[#allocation2 + $0x248] sm:$0xf]
    %v225 = vld [vmem:[#allocation2 + $0x24c] sm:$0xf]
    %v226 = vld [vmem:[#allocation2 + $0x250] sm:$0xf]
    %v227 = vld [vmem:[#allocation2 + $0x254] sm:$0xf]
    %v228 = vld [vmem:[%s2] sm:$0x1]
    %v230 = vperm.slane %v228, 0
    %v382 = vunpack.c.l.b16 %v78
    %v383 = vunpack.c.l.b16 %v79
    %v384 = vunpack.c.l.b16 %v80
    %v385 = vunpack.c.l.b16 %v81
    %v386 = vunpack.c.l.b16 %v82
    %v387 = vunpack.c.l.b16 %v83
    %v388 = vunpack.c.l.b16 %v84
    %v389 = vunpack.c.l.b16 %v85
    %v390 = vunpack.c.l.b16 %v86
    %v391 = vunpack.c.l.b16 %v87
    %v392 = vunpack.c.l.b16 %v88
    %v393 = vunpack.c.l.b16 %v89
    %v394 = vunpack.c.l.b16 %v90
    %v395 = vunpack.c.l.b16 %v91
    %v396 = vunpack.c.l.b16 %v92
    %v397 = vunpack.c.l.b16 %v93
    %v398 = vunpack.c.l.b16 %v94
    %v399 = vunpack.c.l.b16 %v95
    %v400 = vunpack.c.l.b16 %v96
    %v401 = vunpack.c.l.b16 %v97
    %v402 = vunpack.c.l.b16 %v98
    %v403 = vunpack.c.l.b16 %v99
    %v404 = vunpack.c.l.b16 %v100
    %v405 = vunpack.c.l.b16 %v101
    %v406 = vunpack.c.l.b16 %v102
    %v407 = vunpack.c.l.b16 %v103
    %v408 = vunpack.c.l.b16 %v104
    %v409 = vunpack.c.l.b16 %v105
    %v410 = vunpack.c.l.b16 %v106
    %v411 = vunpack.c.l.b16 %v107
    %v412 = vunpack.c.l.b16 %v108
    %v413 = vunpack.c.l.b16 %v109
    %v414 = vunpack.c.l.b16 %v110
    %v415 = vunpack.c.l.b16 %v111
    %v416 = vunpack.c.l.b16 %v112
    %v417 = vunpack.c.l.b16 %v113
    %v418 = vunpack.c.l.b16 %v114
    %v419 = vunpack.c.l.b16 %v115
    %v420 = vunpack.c.l.b16 %v116
    %v421 = vunpack.c.l.b16 %v117
    %v422 = vunpack.c.l.b16 %v118
    %v423 = vunpack.c.l.b16 %v119
    %v424 = vunpack.c.l.b16 %v120
    %v425 = vunpack.c.l.b16 %v121
    %v426 = vunpack.c.l.b16 %v122
    %v427 = vunpack.c.l.b16 %v123
    %v428 = vunpack.c.l.b16 %v124
    %v429 = vunpack.c.l.b16 %v125
    %v430 = vunpack.c.l.b16 %v126
    %v431 = vunpack.c.l.b16 %v127
    %v432 = vunpack.c.l.b16 %v128
    %v433 = vunpack.c.l.b16 %v129
    %v434 = vunpack.c.l.b16 %v130
    %v435 = vunpack.c.l.b16 %v131
    %v436 = vunpack.c.l.b16 %v132
    %v437 = vunpack.c.l.b16 %v133
    %v438 = vunpack.c.l.b16 %v134
    %v439 = vunpack.c.l.b16 %v135
    %v440 = vunpack.c.l.b16 %v136
    %v441 = vunpack.c.l.b16 %v137
    %v442 = vunpack.c.l.b16 %v138
    %v443 = vunpack.c.l.b16 %v139
    %v444 = vunpack.c.l.b16 %v140
    %v445 = vunpack.c.l.b16 %v141
    %v446 = vunpack.c.l.b16 %v142
    %v447 = vunpack.c.l.b16 %v143
    %v448 = vunpack.c.l.b16 %v144
    %v449 = vunpack.c.l.b16 %v145
    %v450 = vunpack.c.l.b16 %v146
    %v451 = vunpack.c.l.b16 %v147
    %v452 = vunpack.c.l.b16 %v148
    %v453 = vunpack.c.l.b16 %v149
    %v454 = vunpack.c.l.b16 %v150
    %v455 = vunpack.c.l.b16 %v151
    %v456 = vunpack.c.l.b16 %v152
    %v457 = vunpack.c.l.b16 %v153
    %v458 = vunpack.c.l.b16 %v154
    %v459 = vunpack.c.l.b16 %v155
    %v460 = vunpack.c.l.b16 %v156
    %v461 = vunpack.c.l.b16 %v157
    %v462 = vunpack.c.l.b16 %v158
    %v463 = vunpack.c.l.b16 %v159
    %v464 = vunpack.c.l.b16 %v160
    %v465 = vunpack.c.l.b16 %v161
    %v466 = vunpack.c.l.b16 %v162
    %v467 = vunpack.c.l.b16 %v163
    %v468 = vunpack.c.l.b16 %v164
    %v469 = vunpack.c.l.b16 %v165
    %v470 = vunpack.c.l.b16 %v166
    %v471 = vunpack.c.l.b16 %v167
    %v472 = vunpack.c.l.b16 %v168
    %v473 = vunpack.c.l.b16 %v169
    %v474 = vunpack.c.l.b16 %v170
    %v475 = vunpack.c.l.b16 %v171
    %v476 = vunpack.c.l.b16 %v172
    %v477 = vunpack.c.l.b16 %v173
    %v478 = vunpack.c.l.b16 %v174
    %v479 = vunpack.c.l.b16 %v175
    %v480 = vunpack.c.l.b16 %v176
    %v481 = vunpack.c.l.b16 %v177
    %v482 = vunpack.c.l.b16 %v178
    %v483 = vunpack.c.l.b16 %v179
    %v484 = vunpack.c.l.b16 %v180
    %v485 = vunpack.c.l.b16 %v181
    %v486 = vunpack.c.l.b16 %v182
    %v487 = vunpack.c.l.b16 %v183
    %v488 = vunpack.c.l.b16 %v184
    %v489 = vunpack.c.l.b16 %v185
    %v490 = vunpack.c.l.b16 %v186
    %v491 = vunpack.c.l.b16 %v187
    %v492 = vunpack.c.l.b16 %v188
    %v493 = vunpack.c.l.b16 %v189
    %v494 = vunpack.c.l.b16 %v190
    %v495 = vunpack.c.l.b16 %v191
    %v496 = vunpack.c.l.b16 %v192
    %v497 = vunpack.c.l.b16 %v193
    %v498 = vunpack.c.l.b16 %v194
    %v499 = vunpack.c.l.b16 %v195
    %v500 = vunpack.c.l.b16 %v196
    %v501 = vunpack.c.l.b16 %v197
    %v502 = vunpack.c.l.b16 %v198
    %v503 = vunpack.c.l.b16 %v199
    %v504 = vunpack.c.l.b16 %v200
    %v505 = vunpack.c.l.b16 %v201
    %v506 = vunpack.c.l.b16 %v202
    %v507 = vunpack.c.l.b16 %v203
    %v508 = vunpack.c.l.b16 %v204
    %v509 = vunpack.c.l.b16 %v205
    %v510 = vunpack.c.l.b16 %v206
    %v511 = vunpack.c.l.b16 %v207
    %v512 = vunpack.c.l.b16 %v208
    %v513 = vunpack.c.l.b16 %v209
    %v514 = vunpack.c.l.b16 %v210
    %v515 = vunpack.c.l.b16 %v211
    %v516 = vunpack.c.l.b16 %v212
    %v517 = vunpack.c.l.b16 %v213
    %v518 = vunpack.c.l.b16 %v214
    %v519 = vunpack.c.l.b16 %v215
    %v520 = vunpack.c.l.b16 %v216
    %v521 = vunpack.c.l.b16 %v217
    %v522 = vunpack.c.l.b16 %v218
    %v523 = vunpack.c.l.b16 %v219
    %v524 = vunpack.c.l.b16 %v220
    %v525 = vunpack.c.l.b16 %v221
    %v526 = vunpack.c.l.b16 %v222
    %v527 = vunpack.c.l.b16 %v223
    %v528 = vunpack.c.l.b16 %v224
    %v529 = vunpack.c.l.b16 %v225
    %v530 = vunpack.c.l.b16 %v226
    %v531 = vunpack.c.l.b16 %v227
    %v532 = vpack.c.b16 %v383, %v382
    %v533 = vpack.c.b16 %v385, %v384
    %v534 = vpack.c.b16 %v387, %v386
    %v535 = vpack.c.b16 %v389, %v388
    %v536 = vpack.c.b16 %v391, %v390
    %v537 = vpack.c.b16 %v393, %v392
    %v538 = vpack.c.b16 %v395, %v394
    %v539 = vpack.c.b16 %v397, %v396
    %v540 = vpack.c.b16 %v399, %v398
    %v541 = vpack.c.b16 %v401, %v400
    %v542 = vpack.c.b16 %v403, %v402
    %v543 = vpack.c.b16 %v405, %v404
    %v544 = vpack.c.b16 %v407, %v406
    %v545 = vpack.c.b16 %v409, %v408
    %v546 = vpack.c.b16 %v411, %v410
    %v547 = vpack.c.b16 %v413, %v412
    %v548 = vpack.c.b16 %v415, %v414
    %v549 = vpack.c.b16 %v417, %v416
    %v550 = vpack.c.b16 %v419, %v418
    %v551 = vpack.c.b16 %v421, %v420
    %v552 = vpack.c.b16 %v423, %v422
    %v553 = vpack.c.b16 %v425, %v424
    %v554 = vpack.c.b16 %v427, %v426
    %v555 = vpack.c.b16 %v429, %v428
    %v556 = vpack.c.b16 %v431, %v430
    %v557 = vpack.c.b16 %v433, %v432
    %v558 = vpack.c.b16 %v435, %v434
    %v559 = vpack.c.b16 %v437, %v436
    %v560 = vpack.c.b16 %v439, %v438
    %v561 = vpack.c.b16 %v441, %v440
    %v562 = vpack.c.b16 %v443, %v442
    %v563 = vpack.c.b16 %v445, %v444
    %v564 = vpack.c.b16 %v447, %v446
    %v565 = vpack.c.b16 %v449, %v448
    %v566 = vpack.c.b16 %v451, %v450
    %v567 = vpack.c.b16 %v453, %v452
    %v568 = vpack.c.b16 %v455, %v454
    %v569 = vpack.c.b16 %v457, %v456
    %v570 = vpack.c.b16 %v459, %v458
    %v571 = vpack.c.b16 %v461, %v460
    %v572 = vpack.c.b16 %v463, %v462
    %v573 = vpack.c.b16 %v465, %v464
    %v574 = vpack.c.b16 %v467, %v466
    %v575 = vpack.c.b16 %v469, %v468
    %v576 = vpack.c.b16 %v471, %v470
    %v577 = vpack.c.b16 %v473, %v472
    %v578 = vpack.c.b16 %v475, %v474
    %v579 = vpack.c.b16 %v477, %v476
    %v580 = vpack.c.b16 %v479, %v478
    %v581 = vpack.c.b16 %v481, %v480
    %v582 = vpack.c.b16 %v483, %v482
    %v583 = vpack.c.b16 %v485, %v484
    %v584 = vpack.c.b16 %v487, %v486
    %v585 = vpack.c.b16 %v489, %v488
    %v586 = vpack.c.b16 %v491, %v490
    %v587 = vpack.c.b16 %v493, %v492
    %v588 = vpack.c.b16 %v495, %v494
    %v589 = vpack.c.b16 %v497, %v496
    %v590 = vpack.c.b16 %v499, %v498
    %v591 = vpack.c.b16 %v501, %v500
    %v592 = vpack.c.b16 %v503, %v502
    %v593 = vpack.c.b16 %v505, %v504
    %v594 = vpack.c.b16 %v507, %v506
    %v595 = vpack.c.b16 %v509, %v508
    %v596 = vpack.c.b16 %v511, %v510
    %v597 = vpack.c.b16 %v513, %v512
    %v598 = vpack.c.b16 %v515, %v514
    %v599 = vpack.c.b16 %v517, %v516
    %v600 = vpack.c.b16 %v519, %v518
    %v601 = vpack.c.b16 %v521, %v520
    %v602 = vpack.c.b16 %v523, %v522
    %v603 = vpack.c.b16 %v525, %v524
    %v604 = vpack.c.b16 %v527, %v526
    %v605 = vpack.c.b16 %v529, %v528
    %v606 = vpack.c.b16 %v531, %v530
    %vm682 = vcmask 392192
    %v684 = vsel %vm682, %v77, 0
    %686 = vmatpush.bf16.msra.mxu0 %v539
    %687 = vmatpush.bf16.msra.mxu0 %v538
    %688 = vmatpush.bf16.msra.mxu0 %v537
    %689 = vmatpush.bf16.msra.mxu0 %v536
    %690 = vmatpush.bf16.msra.mxu0 %v535
    %691 = vmatpush.bf16.msra.mxu0 %v534
    %692 = vmatpush.bf16.msra.mxu0 %v533
    %693 = vmatpush.bf16.msra.mxu0 %v532
    %694 = vmatmul.bf16.gmra.mxu0 %v68
    %v695 = vpop.f32.mrf.mxu0
    %v696 = vadd.f32 %v230, %v695
    %v697 = vpop.f32.mrf.mxu0
    %698 = vdwg.mxu0
    %699 = vmatpush.bf16.msra.mxu0 %v547
    %700 = vmatpush.bf16.msra.mxu0 %v546
    %701 = vmatpush.bf16.msra.mxu0 %v545
    %702 = vmatpush.bf16.msra.mxu0 %v544
    %703 = vmatpush.bf16.msra.mxu0 %v543
    %704 = vmatpush.bf16.msra.mxu0 %v542
    %705 = vmatpush.bf16.msra.mxu0 %v541
    %706 = vmatpush.bf16.msra.mxu0 %v540
    %707 = vmatmul.bf16.gmra.mxu0 %v69
    %v708 = vpop.f32.mrf.mxu0
    %v709 = vadd.f32 %v696, %v708
    %v710 = vpop.f32.mrf.mxu0
    %711 = vdwg.mxu0
    %712 = vmatpush.bf16.msra.mxu0 %v555
    %713 = vmatpush.bf16.msra.mxu0 %v554
    %714 = vmatpush.bf16.msra.mxu0 %v553
    %715 = vmatpush.bf16.msra.mxu0 %v552
    %716 = vmatpush.bf16.msra.mxu0 %v551
    %717 = vmatpush.bf16.msra.mxu0 %v550
    %718 = vmatpush.bf16.msra.mxu0 %v549
    %719 = vmatpush.bf16.msra.mxu0 %v548
    %720 = vmatmul.bf16.gmra.mxu0 %v70
    %v721 = vpop.f32.mrf.mxu0
    %v722 = vadd.f32 %v709, %v721
    %v723 = vpop.f32.mrf.mxu0
    %724 = vdwg.mxu0
    %725 = vmatpush.bf16.msra.mxu0 %v563
    %726 = vmatpush.bf16.msra.mxu0 %v562
    %727 = vmatpush.bf16.msra.mxu0 %v561
    %728 = vmatpush.bf16.msra.mxu0 %v560
    %729 = vmatpush.bf16.msra.mxu0 %v559
    %730 = vmatpush.bf16.msra.mxu0 %v558
    %731 = vmatpush.bf16.msra.mxu0 %v557
    %732 = vmatpush.bf16.msra.mxu0 %v556
    %733 = vmatmul.bf16.gmra.mxu0 %v71
    %v734 = vpop.f32.mrf.mxu0
    %v735 = vadd.f32 %v722, %v734
    %v736 = vpop.f32.mrf.mxu0
    %737 = vdwg.mxu0
    %738 = vmatpush.bf16.msra.mxu0 %v571
    %739 = vmatpush.bf16.msra.mxu0 %v570
    %740 = vmatpush.bf16.msra.mxu0 %v569
    %741 = vmatpush.bf16.msra.mxu0 %v568
    %742 = vmatpush.bf16.msra.mxu0 %v567
    %743 = vmatpush.bf16.msra.mxu0 %v566
    %744 = vmatpush.bf16.msra.mxu0 %v565
    %745 = vmatpush.bf16.msra.mxu0 %v564
    %746 = vmatmul.bf16.gmra.mxu0 %v72
    %v747 = vpop.f32.mrf.mxu0
    %v748 = vadd.f32 %v735, %v747
    %v749 = vpop.f32.mrf.mxu0
    %750 = vdwg.mxu0
    %751 = vmatpush.bf16.msra.mxu0 %v579
    %752 = vmatpush.bf16.msra.mxu0 %v578
    %753 = vmatpush.bf16.msra.mxu0 %v577
    %754 = vmatpush.bf16.msra.mxu0 %v576
    %755 = vmatpush.bf16.msra.mxu0 %v575
    %756 = vmatpush.bf16.msra.mxu0 %v574
    %757 = vmatpush.bf16.msra.mxu0 %v573
    %758 = vmatpush.bf16.msra.mxu0 %v572
    %759 = vmatmul.bf16.gmra.mxu0 %v73
    %v760 = vpop.f32.mrf.mxu0
    %v761 = vadd.f32 %v748, %v760
    %v762 = vpop.f32.mrf.mxu0
    %763 = vdwg.mxu0
    %764 = vmatpush.bf16.msra.mxu0 %v587
    %765 = vmatpush.bf16.msra.mxu0 %v586
    %766 = vmatpush.bf16.msra.mxu0 %v585
    %767 = vmatpush.bf16.msra.mxu0 %v584
    %768 = vmatpush.bf16.msra.mxu0 %v583
    %769 = vmatpush.bf16.msra.mxu0 %v582
    %770 = vmatpush.bf16.msra.mxu0 %v581
    %771 = vmatpush.bf16.msra.mxu0 %v580
    %772 = vmatmul.bf16.gmra.mxu0 %v74
    %v773 = vpop.f32.mrf.mxu0
    %v774 = vadd.f32 %v761, %v773
    %v775 = vpop.f32.mrf.mxu0
    %776 = vdwg.mxu0
    %777 = vmatpush.bf16.msra.mxu0 %v595
    %778 = vmatpush.bf16.msra.mxu0 %v594
    %779 = vmatpush.bf16.msra.mxu0 %v593
    %780 = vmatpush.bf16.msra.mxu0 %v592
    %781 = vmatpush.bf16.msra.mxu0 %v591
    %782 = vmatpush.bf16.msra.mxu0 %v590
    %783 = vmatpush.bf16.msra.mxu0 %v589
    %784 = vmatpush.bf16.msra.mxu0 %v588
    %785 = vmatmul.bf16.gmra.mxu0 %v75
    %v786 = vpop.f32.mrf.mxu0
    %v787 = vadd.f32 %v774, %v786
    %v788 = vpop.f32.mrf.mxu0
    %789 = vdwg.mxu0
    %790 = vmatpush.bf16.msra.mxu0 %v603
    %791 = vmatpush.bf16.msra.mxu0 %v602
    %792 = vmatpush.bf16.msra.mxu0 %v601
    %793 = vmatpush.bf16.msra.mxu0 %v600
    %794 = vmatpush.bf16.msra.mxu0 %v599
    %795 = vmatpush.bf16.msra.mxu0 %v598
    %796 = vmatpush.bf16.msra.mxu0 %v597
    %797 = vmatpush.bf16.msra.mxu0 %v596
    %798 = vmatmul.bf16.gmra.mxu0 %v76
    %v799 = vpop.f32.mrf.mxu0
    %v800 = vadd.f32 %v787, %v799
    %v801 = vpop.f32.mrf.mxu0
    %802 = vdwg.mxu0
    %803 = vmatpush.bf16.msra.mxu0 0
    %804 = vmatpush.bf16.msra.mxu0 0
    %805 = vmatpush.bf16.msra.mxu0 0
    %806 = vmatpush.bf16.msra.mxu0 0
    %807 = vmatpush.bf16.msra.mxu0 0
    %808 = vmatpush.bf16.msra.mxu0 %v606
    %809 = vmatpush.bf16.msra.mxu0 %v605
    %810 = vmatpush.bf16.msra.mxu0 %v604
    %811 = vmatmul.bf16.gmra.mxu0 %v684
    %v812 = vpop.f32.mrf.mxu0
    %v813 = vadd.f32 %v800, %v812
    %v814 = vpop.f32.mrf.mxu0
    %815 = vdwg.mxu0
    %v816 = vand.u32 2147483647, %v813
    %v817 = vsub.f32 0.0, %v816
    %v818 = vmul.f32 %v817, 1.442695
    %v819 = vpow.pop %v818
    %vm820 = vcmp.ge.f32.partialorder %v813, 0.0
    %v821 = vmul.f32 %v819, 2.0
    %v822 = vadd.f32 %v821, 1.0
    %v823 = vadd.f32 %v819, 2.0
    %v824 = vmul.f32 %v819, %v823
    %v825 = vsel %vm820, %v822, %v824
    %v826 = vmul.f32 %v821, %v819
    %v827 = vsel %vm820, %v826, 2.0
    %v828 = vadd.f32 %v825, %v827
    %v829 = vrcp.pop %v828
    %v830 = vmul.f32 %v828, %v829
    %v831 = vsub.f32 1.0, %v830
    %v832 = vmul.f32 %v829, %v831
    %v833 = vadd.f32 %v829, %v832
    %vm834 = vweird.f32 %v828
    %vm835 = vweird.f32 %v829
    %vm836 = vmor %vm834, %vm835
    %v837 = vsel %vm836, %v829, %v833
    %v838 = vand.u32 2147483647, %v828
    %vm839 = vcmp.eq.f32.partialorder %v838, 8.507059e+37
    %v840 = vand.u32 %v828, 2147483648
    %v841 = vor.u32 1.1754944e-38, %v840
    %v842 = vsel %vm839, %v841, %v837
    %v843 = vmul.f32 %v825, %v842
    %v844 = vmul.f32 %v813, %v843
    %v845 = vpack.c.bf16 %v844, %v844
    %v846 = vld [vmem:[%s3] sm:$0xf]
    %v847 = vld [vmem:[%s3 + $0x4] sm:$0xf]
    %v848 = vld [vmem:[%s3 + $0x8] sm:$0xf]
    %v849 = vld [vmem:[%s3 + $0xc] sm:$0xf]
    %v850 = vld [vmem:[%s3 + $0x10] sm:$0xf]
    %v851 = vld [vmem:[%s3 + $0x14] sm:$0xf]
    %v852 = vld [vmem:[%s3 + $0x18] sm:$0xf]
    %v853 = vld [vmem:[%s3 + $0x1c] sm:$0xf]
    %v854 = vld [vmem:[%s3 + $0x20] sm:$0xf]
    %v855 = vld [vmem:[%s3 + $0x24] sm:$0xf]
    %v856 = vld [vmem:[%s3 + $0x28] sm:$0xf]
    %v857 = vld [vmem:[%s3 + $0x2c] sm:$0xf]
    %v858 = vld [vmem:[%s3 + $0x30] sm:$0xf]
    %v859 = vld [vmem:[%s3 + $0x34] sm:$0xf]
    %v860 = vld [vmem:[%s3 + $0x38] sm:$0xf]
    %v861 = vld [vmem:[%s3 + $0x3c] sm:$0xf]
    %v862 = vld [vmem:[%s4] sm:$0x1]
    %v864 = vperm.slane %v862, 0
    %v882 = vunpack.c.l.b16 %v846
    %v883 = vunpack.c.l.b16 %v847
    %v884 = vunpack.c.l.b16 %v848
    %v885 = vunpack.c.l.b16 %v849
    %v886 = vunpack.c.l.b16 %v850
    %v887 = vunpack.c.l.b16 %v851
    %v888 = vunpack.c.l.b16 %v852
    %v889 = vunpack.c.l.b16 %v853
    %v890 = vunpack.c.l.b16 %v854
    %v891 = vunpack.c.l.b16 %v855
    %v892 = vunpack.c.l.b16 %v856
    %v893 = vunpack.c.l.b16 %v857
    %v894 = vunpack.c.l.b16 %v858
    %v895 = vunpack.c.l.b16 %v859
    %v896 = vunpack.c.l.b16 %v860
    %v897 = vunpack.c.l.b16 %v861
    %v898 = vpack.c.b16 %v883, %v882
    %v899 = vpack.c.b16 %v885, %v884
    %v900 = vpack.c.b16 %v887, %v886
    %v901 = vpack.c.b16 %v889, %v888
    %v902 = vpack.c.b16 %v891, %v890
    %v903 = vpack.c.b16 %v893, %v892
    %v904 = vpack.c.b16 %v895, %v894
    %v905 = vpack.c.b16 %v897, %v896
    %914 = vmatpush.bf16.msra.mxu0 %v905
    %915 = vmatpush.bf16.msra.mxu0 %v904
    %916 = vmatpush.bf16.msra.mxu0 %v903
    %917 = vmatpush.bf16.msra.mxu0 %v902
    %918 = vmatpush.bf16.msra.mxu0 %v901
    %919 = vmatpush.bf16.msra.mxu0 %v900
    %920 = vmatpush.bf16.msra.mxu0 %v899
    %921 = vmatpush.bf16.msra.mxu0 %v898
    %922 = vmatmul.bf16.gmra.mxu0 %v845
    %v923 = vpop.f32.mrf.mxu0
    %v924 = vadd.f32 %v864, %v923
    %v925 = vpop.f32.mrf.mxu0
    %926 = vdwg.mxu0
    %v927 = vmul.f32 %v924, %v924
    %vm928 = vcmask 517120
    %v929 = vsel %vm928, %v927, 0.0
    %930 = vadd.xlane.f32.xlu0 %v929
    %v931 = vpop.xlane.xlu0 %930
    %v932 = vmax.f32 %v931, 1e-24
    %v933 = vrsqrt.pop %v932
    %v934 = vmul.f32 %v933, %v932
    %v935 = vmul.f32 %v934, %v933
    %v936 = vmul.f32 0.5, %v935
    %v937 = vsub.f32 1.5, %v936
    %v938 = vmul.f32 %v933, %v937
    %vm939 = vweird.f32 %v932
    %vm940 = vweird.f32 %v933
    %vm941 = vmor %vm939, %vm940
    %v942 = vsel %vm941, %v933, %v938
    %v943 = vmul.f32 %v924, %v942
    %944 = vst.msk [vmem:[#allocation5] sm:$0x3] %vm928, %v943
    // Predicated region
    $region26: #{inertial_encoder.1} parent=1 // pred_check
      _
    $region27: #{inertial_encoder.1} parent=1 // pred_check_branch
      %946 = sbr.rel (0) target = $region29
    $region28: #{inertial_encoder.1} parent=1 // pred_region
      %948 = vsyncadd [#allocation4], 0
      %s950 = sshll.u32 [#allocation5], 4
      %s951 = int_to_ptr.vmem [resolvable:$true] %s950
      %s952 = sshll.u32 %s5, 4
      %s953 = int_to_ptr.hbm [resolvable:$true] %s952
      %955 = dma.vmem_to_hbm [thread:$0]  %s951, 32, %s953, [#allocation4]
    $region29: #{inertial_encoder.1} parent=1 // pred_fallthru
      _
    // Predicated region
    $region30: #{inertial_encoder.1} parent=1 // pred_check
      _
    $region31: #{inertial_encoder.1} parent=1 // pred_check_branch
      %957 = sbr.rel (0) target = $region33
    $region32: #{inertial_encoder.1} parent=1 // pred_region
      %959 = dma.done [#allocation4], 32
    $region33: #{inertial_encoder.1} parent=1 // pred_fallthru
      _
    %960 = vsyncpa [#allocation3], 1
    %961 = vsyncpa [#allocation4], 1

</llo_original>
